<compile_context>
chip_gen: v6e
topology: v6e:2x2x1
jax: 0.10.0
libtpu: 0.0.40
codegen_flags: <defaults>
</compile_context>

<pallas_src>
import functools

import jax
import jax.numpy as jnp
from jax.experimental import pallas as pl
from jax.experimental.pallas import tpu as pltpu


def _round_up(x: int, m: int) -> int:
    return ((x + m - 1) // m) * m


def _choose_tile(dim: int, max_tile: int, multiple: int):
    """Pick a tile (multiple of `multiple`, <= max(max_tile, multiple)) and padded dim.

    Prefers a tile that divides `dim` exactly so no padding and no post-kernel slice
    copy are needed (each of those costs an extra full HBM round trip).
    """
    max_tile = max(multiple, (max_tile // multiple) * multiple)
    if dim % multiple == 0:
        t = min(max_tile, dim)
        while t >= multiple:
            if dim % t == 0:
                return t, dim
            t -= multiple
    t = min(max_tile, _round_up(dim, multiple))
    return t, _round_up(dim, t)


def _vmem_capacity_bytes() -> int:
    try:
        return int(pltpu.get_tpu_info().vmem_capacity_bytes)
    except Exception:
        return 64 * 1024 * 1024  # conservative fallback (v7x per-core VMEM)


def _logits_lse_kernel(x_ref, w_ref, b_ref, logits_ref, lse_ref, m_sc, l_sc):
    """grid = (vocab_tiles, row_tiles): j outer over vocab, i inner over rows.

    Writes un-normalised logits for tile (i, j) and maintains a per-row online
    log-sum-exp (running max m_sc / running sum-exp l_sc, indexed by row tile i).
    """
    j = pl.program_id(0)   # vocab tile (outer) -> each weight/bias tile fetched once
    i = pl.program_id(1)   # row tile (inner)

    logits = jnp.dot(x_ref[...], w_ref[...],
                     preferred_element_type=jnp.float32) + b_ref[...]
    logits_ref[...] = logits          # un-normalised logits, fixed up in pass 2

    @pl.when(j == 0)
    def _init():
        m_sc[i] = jnp.full(m_sc.shape[1:], -jnp.inf, jnp.float32)
        l_sc[i] = jnp.zeros(l_sc.shape[1:], jnp.float32)

    m_prev = m_sc[i]
    l_prev = l_sc[i]
    m_new = jnp.maximum(m_prev, jnp.max(logits, axis=-1, keepdims=True))
    l_new = (l_prev * jnp.exp(m_prev - m_new)
             + jnp.sum(jnp.exp(logits - m_new), axis=-1, keepdims=True))
    m_sc[i] = m_new
    l_sc[i] = l_new
    # Running LSE: cheap (tm x 1).  The value written during the last vocab sweep
    # (j == vocab_tiles - 1) is the final one; earlier writes are valid partials, so
    # uninitialised VMEM is never flushed to HBM.
    lse_ref[...] = m_new + jnp.log(l_new)


def _sub_lse_kernel(logits_ref, lse_ref, o_ref):
    # Elementwise fix-up: log_softmax = logits - lse (row-broadcast). No matmul here.
    o_ref[...] = (logits_ref[...] - lse_ref[...]).astype(o_ref.dtype)


@functools.partial(jax.jit, static_argnames=("tm", "tv", "out_dtype"))
def projection_layer(x, w_t, b, *, tm=None, tv=None, out_dtype=None):
    """x: (batch, seq, D); w_t: (D, V) = weight.T; b: (V,). Returns (batch, seq, V) log-probs."""
    batch, seq, D = x.shape
    V = w_t.shape[1]
    M = batch * seq
    if out_dtype is None:
        out_dtype = x.dtype          # module semantics; pass jnp.bfloat16 to halve HBM writes
    out_dtype = jnp.dtype(out_dtype)

    vmem_cap = _vmem_capacity_bytes()
    vmem_limit = min(max(int(vmem_cap * 3 // 4), 32 * 1024 * 1024), 112 * 1024 * 1024)

    if tv is None:
        tv = 1024                                   # keeps (D, tv) weight buffers modest (v7x-safe)
    if tm is None:
        tm = 1024 if vmem_cap >= 96 * 1024 * 1024 else 512   # amortise each weight byte

    tm_eff, Mp = _choose_tile(M, tm, 16)    # 16: bf16 sublane packing
    tv_eff, Vp = _choose_tile(V, tv, 128)   # 128: lane-dense output stores
    m_tiles = Mp // tm_eff
    v_tiles = Vp // tv_eff

    x2 = x.reshape(M, D)
    if Mp != M:
        x2 = jnp.pad(x2, ((0, Mp - M), (0, 0)))
    wt = w_t
    b1 = b.astype(jnp.float32)
    if Vp != V:
        wt = jnp.pad(wt, ((0, 0), (0, Vp - V)))
        # Padded vocab columns get a very negative bias so they contribute ~0 to the LSE
        # (they are sliced off before returning).
        b1 = jnp.pad(b1, (0, Vp - V), constant_values=-1e30)
    b2 = b1.reshape(1, Vp)

    # bf16 matmul inputs (MXU-native, halves weight DMA); f32 accumulation / softmax math.
    x_bf = x2.astype(jnp.bfloat16)
    w_bf = wt.astype(jnp.bfloat16)

    # ---- Pass 1: un-normalised logits + per-row log-sum-exp (single matmul, W streamed once).
    cost1 = pl.CostEstimate(
        flops=2 * Mp * D * Vp,
        transcendentals=Mp * Vp,
        bytes_accessed=(v_tiles * Mp * D * 2        # activations re-streamed per vocab tile
                        + D * Vp * 2                # weights streamed once
                        + Mp * Vp * 4               # logits written once
                        + v_tiles * Mp * 4),        # running lse writes
    )
    logits32, lse = pl.pallas_call(
        _logits_lse_kernel,
        out_shape=(jax.ShapeDtypeStruct((Mp, Vp), jnp.float32),
                   jax.ShapeDtypeStruct((Mp, 1), jnp.float32)),
        grid_spec=pltpu.PrefetchScalarGridSpec(
            num_scalar_prefetch=0,
            grid=(v_tiles, m_tiles),                    # vocab outer, rows inner
            in_specs=[
                pl.BlockSpec((tm_eff, D), lambda j, i: (i, 0)),    # activations
                pl.BlockSpec((D, tv_eff), lambda j, i: (0, j)),    # weights: constant in i
                pl.BlockSpec((1, tv_eff), lambda j, i: (0, j)),    # bias
            ],
            out_specs=(
                pl.BlockSpec((tm_eff, tv_eff), lambda j, i: (i, j)),   # logits tile
                pl.BlockSpec((tm_eff, 1), lambda j, i: (i, 0)),        # per-row lse
            ),
            scratch_shapes=[
                pltpu.VMEM((m_tiles, tm_eff, 1), jnp.float32),   # running max (all row tiles)
                pltpu.VMEM((m_tiles, tm_eff, 1), jnp.float32),   # running sum-exp
            ],
        ),
        compiler_params=pltpu.CompilerParams(
            dimension_semantics=("arbitrary", "arbitrary"),
            vmem_limit_bytes=vmem_limit,
        ),
        cost_estimate=cost1,
    )(x_bf, w_bf, b2)

    # ---- Pass 2: tiny elementwise fix-up out = logits - lse (no matmul, no weight traffic).
    # When the output dtype is f32 the logits buffer is reused in place via aliasing.
    alias = {0: 0} if out_dtype == jnp.float32 else {}
    cost2 = pl.CostEstimate(
        flops=Mp * Vp,
        transcendentals=0,
        bytes_accessed=Mp * Vp * (4 + out_dtype.itemsize) + v_tiles * Mp * 4,
    )
    out = pl.pallas_call(
        _sub_lse_kernel,
        out_shape=jax.ShapeDtypeStruct((Mp, Vp), out_dtype),
        grid_spec=pltpu.PrefetchScalarGridSpec(
            num_scalar_prefetch=0,
            grid=(m_tiles, v_tiles),
            in_specs=[
                pl.BlockSpec((tm_eff, tv_eff), lambda i, j: (i, j)),
                pl.BlockSpec((tm_eff, 1), lambda i, j: (i, 0)),
            ],
            out_specs=pl.BlockSpec((tm_eff, tv_eff), lambda i, j: (i, j)),
        ),
        compiler_params=pltpu.CompilerParams(
            dimension_semantics=("parallel", "arbitrary"),
            vmem_limit_bytes=vmem_limit,
        ),
        cost_estimate=cost2,
        input_output_aliases=alias,
    )(logits32, lse)

    if Mp != M or Vp != V:
        out = out[:M, :V]
    return out.reshape(batch, seq, V)


if __name__ == "__main__":
    # Small shapes consistent with the module: (batch, seq, model_dim) -> (batch, seq, vocab)
    batch, seq, model_dimension, vocab_size = 2, 8, 32, 128

    key = jax.random.PRNGKey(0)
    kx, kw, kb = jax.random.split(key, 3)

    x = jax.random.normal(kx, (batch, seq, model_dimension), dtype=jnp.float32)
    # Deterministic init mimicking nn.Linear shapes: weight (vocab, model_dim), bias (vocab,)
    bound = 1.0 / (model_dimension ** 0.5)
    w = jax.random.uniform(kw, (vocab_size, model_dimension),
                           minval=-bound, maxval=bound, dtype=jnp.float32)
    b = jax.random.uniform(kb, (vocab_size,),
                           minval=-bound, maxval=bound, dtype=jnp.float32)
    w_t = w.T  # (model_dim, vocab)

    out = projection_layer(x, w_t, b)
    out = jax.block_until_ready(out)
    assert out.shape == (batch, seq, vocab_size)
    assert out.dtype == x.dtype

    # Reference 1: same bf16 input rounding, f32 math -> tight tolerance.
    xr = x.astype(jnp.bfloat16).astype(jnp.float32)
    wr = w.astype(jnp.bfloat16).astype(jnp.float32)
    ref_bf = jax.nn.log_softmax(jnp.einsum("bsd,vd->bsv", xr, wr) + b, axis=-1)
    assert jnp.allclose(out, ref_bf, atol=1e-4, rtol=1e-4), "mismatch vs bf16-rounded reference"

    # Reference 2: full f32 reference -> loose tolerance (bf16 matmul inputs).
    ref_f32 = jax.nn.log_softmax(jnp.einsum("bsd,vd->bsv", x, w) + b, axis=-1)
    assert jnp.allclose(out, ref_f32, atol=5e-2, rtol=5e-2), "mismatch vs f32 reference"

    print("KERNEL_OK")
</pallas_src>

<mosaic_0001>
module attributes {stable_mosaic.version = 11 : i64} {
  func.func @_logits_lse_kernel(%arg0: i32, %arg1: i32, %arg2: memref<16x32xbf16, #tpu.memory_space<vmem>>, %arg3: memref<32x128xbf16, #tpu.memory_space<vmem>>, %arg4: memref<1x128xf32, #tpu.memory_space<vmem>>, %arg5: memref<16x128xf32, #tpu.memory_space<vmem>>, %arg6: memref<16x1xf32, #tpu.memory_space<vmem>>, %arg7: memref<1x16x1xf32, #tpu.memory_space<vmem>>, %arg8: memref<1x16x1xf32, #tpu.memory_space<vmem>>) attributes {dimension_semantics = [#tpu.dimension_semantics<arbitrary>, #tpu.dimension_semantics<arbitrary>], iteration_bounds = array<i64: 1, 1>, scalar_prefetch = 0 : i64, scratch_operands = 2 : i64, tpu.core_type = #tpu.core_type<tc>, window_params = [{transform_indices = @transform_0, window_bounds = array<i64: 16, 32>}, {transform_indices = @transform_1, window_bounds = array<i64: 32, 128>}, {transform_indices = @transform_2, window_bounds = array<i64: 1, 128>}, {transform_indices = @transform_3, window_bounds = array<i64: 16, 128>}, {transform_indices = @transform_4, window_bounds = array<i64: 16, 1>}]} {
    %c0 = arith.constant 0 : index
    %c0_0 = arith.constant 0 : index
    %0 = vector.load %arg2[%c0, %c0_0] : memref<16x32xbf16, #tpu.memory_space<vmem>>, vector<16x32xbf16>
    %c0_1 = arith.constant 0 : index
    %c0_2 = arith.constant 0 : index
    %1 = vector.load %arg3[%c0_1, %c0_2] : memref<32x128xbf16, #tpu.memory_space<vmem>>, vector<32x128xbf16>
    %cst = arith.constant dense<0.000000e+00> : vector<16x128xf32>
    %2 = tpu.matmul %0, %1, %cst {dimension_numbers = #tpu.dot_dimension_numbers<[1], [0], [0], [1], [0, 0, 1, 1], [], []>} : vector<16x32xbf16>, vector<32x128xbf16>, vector<16x128xf32> -> vector<16x128xf32>
    %c0_3 = arith.constant 0 : index
    %c0_4 = arith.constant 0 : index
    %3 = vector.load %arg4[%c0_3, %c0_4] : memref<1x128xf32, #tpu.memory_space<vmem>>, vector<1x128xf32>
    %4 = vector.broadcast %3 : vector<1x128xf32> to vector<16x128xf32>
    %5 = arith.addf %2, %4 : vector<16x128xf32>
    %c0_5 = arith.constant 0 : index
    %c0_6 = arith.constant 0 : index
    %6 = vector.load %arg5[%c0_5, %c0_6] : memref<16x128xf32, #tpu.memory_space<vmem>>, vector<16x128xf32>
    tpu.vector_store %arg5[%c0_5, %c0_6], %5 {strides = array<i32>} : memref<16x128xf32, #tpu.memory_space<vmem>>, vector<16x128xf32>,
    %c0_i32 = arith.constant 0 : i32
    %7 = arith.cmpi eq, %arg0, %c0_i32 : i32
    %8 = arith.extui %7 : i1 to i32
    %c0_i32_7 = arith.constant 0 : i32
    %9 = arith.cmpi ne, %8, %c0_i32_7 : i32
    scf.if %9 {
      %cst_20 = arith.constant 0xFF800000 : f32
      %39 = vector.broadcast %cst_20 : f32 to vector<16x1xf32>
      %40 = arith.index_cast %arg1 : i32 to index
      %c0_21 = arith.constant 0 : index
      %c0_22 = arith.constant 0 : index
      %41 = vector.load %arg7[%40, %c0_21, %c0_22] : memref<1x16x1xf32, #tpu.memory_space<vmem>>, vector<1x16x1xf32>
      %42 = vector.shape_cast %41 : vector<1x16x1xf32> to vector<16x1xf32>
      %43 = vector.shape_cast %39 : vector<16x1xf32> to vector<1x16x1xf32>
      tpu.vector_store %arg7[%40, %c0_21, %c0_22], %43 {strides = array<i32>} : memref<1x16x1xf32, #tpu.memory_space<vmem>>, vector<1x16x1xf32>,
      %cst_23 = arith.constant 0.000000e+00 : f32
      %44 = vector.broadcast %cst_23 : f32 to vector<16x1xf32>
      %45 = arith.index_cast %arg1 : i32 to index
      %c0_24 = arith.constant 0 : index
      %c0_25 = arith.constant 0 : index
      %46 = vector.load %arg8[%45, %c0_24, %c0_25] : memref<1x16x1xf32, #tpu.memory_space<vmem>>, vector<1x16x1xf32>
      %47 = vector.shape_cast %46 : vector<1x16x1xf32> to vector<16x1xf32>
      %48 = vector.shape_cast %44 : vector<16x1xf32> to vector<1x16x1xf32>
      tpu.vector_store %arg8[%45, %c0_24, %c0_25], %48 {strides = array<i32>} : memref<1x16x1xf32, #tpu.memory_space<vmem>>, vector<1x16x1xf32>,
    } else {
    }
    %10 = arith.index_cast %arg1 : i32 to index
    %c0_8 = arith.constant 0 : index
    %c0_9 = arith.constant 0 : index
    %11 = vector.load %arg7[%10, %c0_8, %c0_9] : memref<1x16x1xf32, #tpu.memory_space<vmem>>, vector<1x16x1xf32>
    %12 = vector.shape_cast %11 : vector<1x16x1xf32> to vector<16x1xf32>
    %13 = arith.index_cast %arg1 : i32 to index
    %c0_10 = arith.constant 0 : index
    %c0_11 = arith.constant 0 : index
    %14 = vector.load %arg8[%13, %c0_10, %c0_11] : memref<1x16x1xf32, #tpu.memory_space<vmem>>, vector<1x16x1xf32>
    %15 = vector.shape_cast %14 : vector<1x16x1xf32> to vector<16x1xf32>
    %cst_12 = arith.constant dense<0xFF800000> : vector<16xf32>
    %16 = vector.multi_reduction <maximumf>, %5, %cst_12 [1] : vector<16x128xf32> to vector<16xf32>
    %17 = vector.shape_cast %16 : vector<16xf32> to vector<16x1xf32>
    %18 = arith.maximumf %12, %17 : vector<16x1xf32>
    %19 = arith.subf %12, %18 : vector<16x1xf32>
    %20 = math.exp %19 : vector<16x1xf32>
    %21 = arith.mulf %15, %20 : vector<16x1xf32>
    %22 = vector.broadcast %18 : vector<16x1xf32> to vector<16x128xf32>
    %23 = arith.subf %5, %22 : vector<16x128xf32>
    %24 = math.exp %23 : vector<16x128xf32>
    %cst_13 = arith.constant dense<0.000000e+00> : vector<16xf32>
    %25 = vector.multi_reduction <add>, %24, %cst_13 [1] : vector<16x128xf32> to vector<16xf32>
    %26 = vector.shape_cast %25 : vector<16xf32> to vector<16x1xf32>
    %27 = arith.addf %21, %26 : vector<16x1xf32>
    %28 = arith.index_cast %arg1 : i32 to index
    %c0_14 = arith.constant 0 : index
    %c0_15 = arith.constant 0 : index
    %29 = vector.load %arg7[%28, %c0_14, %c0_15] : memref<1x16x1xf32, #tpu.memory_space<vmem>>, vector<1x16x1xf32>
    %30 = vector.shape_cast %29 : vector<1x16x1xf32> to vector<16x1xf32>
    %31 = vector.shape_cast %18 : vector<16x1xf32> to vector<1x16x1xf32>
    tpu.vector_store %arg7[%28, %c0_14, %c0_15], %31 {strides = array<i32>} : memref<1x16x1xf32, #tpu.memory_space<vmem>>, vector<1x16x1xf32>,
    %32 = arith.index_cast %arg1 : i32 to index
    %c0_16 = arith.constant 0 : index
    %c0_17 = arith.constant 0 : index
    %33 = vector.load %arg8[%32, %c0_16, %c0_17] : memref<1x16x1xf32, #tpu.memory_space<vmem>>, vector<1x16x1xf32>
    %34 = vector.shape_cast %33 : vector<1x16x1xf32> to vector<16x1xf32>
    %35 = vector.shape_cast %27 : vector<16x1xf32> to vector<1x16x1xf32>
    tpu.vector_store %arg8[%32, %c0_16, %c0_17], %35 {strides = array<i32>} : memref<1x16x1xf32, #tpu.memory_space<vmem>>, vector<1x16x1xf32>,
    %36 = math.log %27 : vector<16x1xf32>
    %37 = arith.addf %18, %36 : vector<16x1xf32>
    %c0_18 = arith.constant 0 : index
    %c0_19 = arith.constant 0 : index
    %38 = vector.load %arg6[%c0_18, %c0_19] : memref<16x1xf32, #tpu.memory_space<vmem>>, vector<16x1xf32>
    tpu.vector_store %arg6[%c0_18, %c0_19], %37 {strides = array<i32>} : memref<16x1xf32, #tpu.memory_space<vmem>>, vector<16x1xf32>,
    return
  }
  func.func @transform_0(%arg0: i32, %arg1: i32) -> (i32, i32) {
    %c0_i32 = arith.constant 0 : i32
    %c0_i32_0 = arith.constant 0 : i32
    return %arg1, %c0_i32 : i32, i32
  }
  func.func @transform_1(%arg0: i32, %arg1: i32) -> (i32, i32) {
    %c0_i32 = arith.constant 0 : i32
    %c0_i32_0 = arith.constant 0 : i32
    return %c0_i32, %arg0 : i32, i32
  }
  func.func @transform_2(%arg0: i32, %arg1: i32) -> (i32, i32) {
    %c0_i32 = arith.constant 0 : i32
    %c0_i32_0 = arith.constant 0 : i32
    return %c0_i32, %arg0 : i32, i32
  }
  func.func @transform_3(%arg0: i32, %arg1: i32) -> (i32, i32) {
    %c0_i32 = arith.constant 0 : i32
    return %arg1, %arg0 : i32, i32
  }
  func.func @transform_4(%arg0: i32, %arg1: i32) -> (i32, i32) {
    %c0_i32 = arith.constant 0 : i32
    %c0_i32_0 = arith.constant 0 : i32
    return %arg1, %c0_i32 : i32, i32
  }
}

module attributes {stable_mosaic.version = 11 : i64} {
  func.func @_sub_lse_kernel(%arg0: i32, %arg1: i32, %arg2: memref<16x128xf32, #tpu.memory_space<vmem>>, %arg3: memref<16x1xf32, #tpu.memory_space<vmem>>, %arg4: memref<16x128xf32, #tpu.memory_space<vmem>>) attributes {dimension_semantics = [#tpu.dimension_semantics<parallel>, #tpu.dimension_semantics<arbitrary>], iteration_bounds = array<i64: 1, 1>, scalar_prefetch = 0 : i64, scratch_operands = 0 : i64, tpu.core_type = #tpu.core_type<tc>, window_params = [{transform_indices = @transform_0, window_bounds = array<i64: 16, 128>}, {transform_indices = @transform_1, window_bounds = array<i64: 16, 1>}, {transform_indices = @transform_2, window_bounds = array<i64: 16, 128>}]} {
    %c0 = arith.constant 0 : index
    %c0_0 = arith.constant 0 : index
    %0 = vector.load %arg2[%c0, %c0_0] : memref<16x128xf32, #tpu.memory_space<vmem>>, vector<16x128xf32>
    %c0_1 = arith.constant 0 : index
    %c0_2 = arith.constant 0 : index
    %1 = vector.load %arg3[%c0_1, %c0_2] : memref<16x1xf32, #tpu.memory_space<vmem>>, vector<16x1xf32>
    %2 = vector.broadcast %1 : vector<16x1xf32> to vector<16x128xf32>
    %3 = arith.subf %0, %2 : vector<16x128xf32>
    %c0_3 = arith.constant 0 : index
    %c0_4 = arith.constant 0 : index
    %4 = vector.load %arg4[%c0_3, %c0_4] : memref<16x128xf32, #tpu.memory_space<vmem>>, vector<16x128xf32>
    tpu.vector_store %arg4[%c0_3, %c0_4], %3 {strides = array<i32>} : memref<16x128xf32, #tpu.memory_space<vmem>>, vector<16x128xf32>,
    return
  }
  func.func @transform_0(%arg0: i32, %arg1: i32) -> (i32, i32) {
    %c0_i32 = arith.constant 0 : i32
    return %arg0, %arg1 : i32, i32
  }
  func.func @transform_1(%arg0: i32, %arg1: i32) -> (i32, i32) {
    %c0_i32 = arith.constant 0 : i32
    %c0_i32_0 = arith.constant 0 : i32
    return %arg0, %c0_i32 : i32, i32
  }
  func.func @transform_2(%arg0: i32, %arg1: i32) -> (i32, i32) {
    %c0_i32 = arith.constant 0 : i32
    return %arg0, %arg1 : i32, i32
  }
}

</mosaic_0001>

<llo_original>
// kernel: projection_layer.3
$region0: #{projection_layer.3}
  #allocation0 [shape = 'u32[]', space=smem, size = 0x4, offset = 0x4, fixed_abs, tag = 'smem constant byte address 0x4 - core index']
  #allocation1 [shape = 'u32[144,128]{1,0:T(1,128)}', space=vmem, size = 0x12000, scoped, tag = 'internal scratch']
  %s0 = inlined_call_operand.vmem [shape: f32[16,128], index: 0, kind: input, shape index: {}, may-alias: {0,2}]
  %s1 = inlined_call_operand.vmem [shape: f32[16,1], index: 1, kind: input, shape index: {}]
  %s2 = inlined_call_operand.vmem [shape: f32[16,128], index: 2, kind: output, shape index: {}, may-alias: {0,2}]
  %s3 = sld [smem:[#allocation0]]
  $region18: #{projection_layer.3} parent=0
    _
  %s5 = ssub.s32 1, %s3
  %s6 = scalar_select 0, %s5, %s3
  // Predicated region
  $region2: #{projection_layer.3} parent=0 // pred_check
    _
  $region3: #{projection_layer.3} parent=0 // pred_check_branch
    %8 = sbr.rel (0) target = $region5
  $region4: #{projection_layer.3} parent=0 // pred_region
    _
  $region5: #{projection_layer.3} parent=0 // pred_fallthru
    _
  // Predicated region
  $region6: #{projection_layer.3} parent=0 // pred_check
    _
  $region7: #{projection_layer.3} parent=0 // pred_check_branch
    %10 = sbr.rel (0) target = $region9
  $region8: #{projection_layer.3} parent=0 // pred_region
    _
  $region9: #{projection_layer.3} parent=0 // pred_fallthru
    _
  %v11 = vld [vmem:[%s0] sm:$0xff]
  %v12 = vld [vmem:[%s0 + $0x8] sm:$0xff]
  %v13 = vld [vmem:[%s1] sm:$0xff]
  %v14 = vld [vmem:[%s1 + $0x8] sm:$0xff]
  %16 = vset.pattern.permute.xlu0 0
  %17 = vperm.xlu0 %16, %v13
  %v18 = vpop.permute.xlu0 %17
  %21 = vset.pattern.permute.xlu0 0
  %22 = vperm.xlu0 %21, %v14
  %v23 = vpop.permute.xlu0 %22
  %v25 = vsub.f32 %v11, %v18
  %v26 = vsub.f32 %v12, %v23
  %27 = vst [vmem:[%s2] sm:$0xff] %v25
  %28 = vst [vmem:[%s2 + $0x8] sm:$0xff] %v26
  // Predicated region
  $region10: #{projection_layer.3} parent=0 // pred_check
    _
  $region11: #{projection_layer.3} parent=0 // pred_check_branch
    %30 = sbr.rel (0) target = $region13
  $region12: #{projection_layer.3} parent=0 // pred_region
    _
  $region13: #{projection_layer.3} parent=0 // pred_fallthru
    _
  // Predicated region
  $region14: #{projection_layer.3} parent=0 // pred_check
    _
  $region15: #{projection_layer.3} parent=0 // pred_check_branch
    %32 = sbr.rel (0) target = $region17
  $region16: #{projection_layer.3} parent=0 // pred_region
    _
  $region17: #{projection_layer.3} parent=0 // pred_fallthru
    _

// kernel: projection_layer.2
$region0: #{projection_layer.2}
  #allocation0 [shape = 'u32[]', space=smem, size = 0x4, offset = 0x4, fixed_abs, tag = 'smem constant byte address 0x4 - core index']
  #allocation1 [shape = 'u32[144,128]{1,0:T(1,128)}', space=vmem, size = 0x12000, scoped, tag = 'internal scratch']
  #allocation2 [shape = 'f32[1,16,1]{2,1,0:T(8,128)}', space=vmem, size = 0x2000, scoped, tag = 'scratch operand']
  #allocation3 [shape = 'f32[1,16,1]{2,1,0:T(8,128)}', space=vmem, size = 0x2000, scoped, tag = 'scratch operand']
  %s0 = inlined_call_operand.vmem [shape: bf16[16,32], index: 0, kind: input, shape index: {}]
  %s1 = inlined_call_operand.vmem [shape: bf16[32,128], index: 1, kind: input, shape index: {}]
  %s2 = inlined_call_operand.vmem [shape: f32[1,128], index: 2, kind: input, shape index: {}]
  %s3 = inlined_call_operand.vmem [shape: f32[16,128], index: 3, kind: output, shape index: {0}]
  %s4 = inlined_call_operand.vmem [shape: f32[16,1], index: 4, kind: output, shape index: {1}]
  %5 = xla_tuple %s3, %s4
  %s6 = sld [smem:[#allocation0]]
  $region34: #{projection_layer.2} parent=0
    _
  %s8 = ssub.s32 1, %s6
  %s9 = scalar_select 0, %s8, %s6
  // Predicated region
  $region2: #{projection_layer.2} parent=0 // pred_check
    _
  $region3: #{projection_layer.2} parent=0 // pred_check_branch
    %11 = sbr.rel (0) target = $region5
  $region4: #{projection_layer.2} parent=0 // pred_region
    _
  $region5: #{projection_layer.2} parent=0 // pred_fallthru
    _
  // Predicated region
  $region6: #{projection_layer.2} parent=0 // pred_check
    _
  $region7: #{projection_layer.2} parent=0 // pred_check_branch
    %13 = sbr.rel (0) target = $region9
  $region8: #{projection_layer.2} parent=0 // pred_region
    _
  $region9: #{projection_layer.2} parent=0 // pred_fallthru
    _
  // Predicated region
  $region10: #{projection_layer.2} parent=0 // pred_check
    _
  $region11: #{projection_layer.2} parent=0 // pred_check_branch
    %15 = sbr.rel (0) target = $region13
  $region12: #{projection_layer.2} parent=0 // pred_region
    _
  $region13: #{projection_layer.2} parent=0 // pred_fallthru
    _
  %v17 = vld [vmem:[%s0] sm:$0xf]
  %v18 = vld [vmem:[%s0 + $0x4] sm:$0xf]
  %v19 = vld [vmem:[%s1] sm:$0xf]
  %v20 = vld [vmem:[%s1 + $0x4] sm:$0xf]
  %v21 = vld [vmem:[%s1 + $0x8] sm:$0xf]
  %v22 = vld [vmem:[%s1 + $0xc] sm:$0xf]
  %v23 = vld [vmem:[%s2] sm:$0x1]
  %v25 = vlaneseq
  %v26 = vshrl.u32 %v25, 7
  %v27 = vsub.s32 0, %v26
  %v28 = vrot.slane %v23, %v27
  %v32 = vunpack.c.l.b16 %v17
  %v33 = vunpack.c.l.b16 %v18
  %v34 = vpack.c.b16 %v33, %v32
  %v39 = vunpack.c.l.b16 %v19
  %v40 = vunpack.c.l.b16 %v20
  %v41 = vunpack.c.l.b16 %v21
  %v42 = vunpack.c.l.b16 %v22
  %v43 = vpack.c.b16 %v40, %v39
  %v44 = vpack.c.b16 %v42, %v41
  %vm47 = vcmask 261120
  %v49 = vsel %vm47, %v34, 0
  %51 = vmatprep.subr.bf16.mxu0 0
  %52 = vmatpush1.bf16.msra.mxu0 0
  %53 = vmatprep.subr.bf16.mxu0 0
  %54 = vmatpush1.bf16.msra.mxu0 0
  %55 = vmatprep.subr.bf16.mxu0 0
  %56 = vmatpush1.bf16.msra.mxu0 0
  %57 = vmatprep.subr.bf16.mxu0 0
  %58 = vmatpush1.bf16.msra.mxu0 0
  %59 = vmatprep.subr.bf16.mxu0 0
  %60 = vmatpush1.bf16.msra.mxu0 0
  %61 = vmatprep.subr.bf16.mxu0 0
  %62 = vmatpush1.bf16.msra.mxu0 0
  %63 = vmatprep.subr.bf16.mxu0 0
  %64 = vmatpush1.bf16.msra.mxu0 %v44
  %65 = vmatprep.subr.bf16.mxu0 0
  %66 = vmatpush1.bf16.msra.mxu0 %v43
  %67 = vmatprep.subr.bf16.mxu0 0
  %68 = vmatpush2.bf16.msra.mxu0 0
  %69 = vmatprep.subr.bf16.mxu0 0
  %70 = vmatpush2.bf16.msra.mxu0 0
  %71 = vmatprep.subr.bf16.mxu0 0
  %72 = vmatpush2.bf16.msra.mxu0 0
  %73 = vmatprep.subr.bf16.mxu0 0
  %74 = vmatpush2.bf16.msra.mxu0 0
  %75 = vmatprep.subr.bf16.mxu0 0
  %76 = vmatpush2.bf16.msra.mxu0 0
  %77 = vmatprep.subr.bf16.mxu0 0
  %78 = vmatpush2.bf16.msra.mxu0 0
  %79 = vmatprep.subr.bf16.mxu0 0
  %80 = vmatpush2.bf16.msra.mxu0 0
  %81 = vmatprep.subr.bf16.mxu0 0
  %82 = vmatpush2.bf16.msra.mxu0 0
  %83 = vmatprep.mubr.bf16.mxu0 0
  %84 = vmatmul.mubr.bf16.gmra.mxu0 %v49
  %v85 = vpop.f32.mrf.mxu0
  %v86 = vadd.f32 %v28, %v85
  %v87 = vpop.f32.mrf.mxu0
  %v88 = vpop.f32.mrf.mxu0
  %v89 = vadd.f32 %v28, %v88
  %v90 = vpop.f32.mrf.mxu0
  %91 = vdwg.mxu0
  %92 = vst [vmem:[%s3] sm:$0xff] %v86
  %93 = vst [vmem:[%s3 + $0x8] sm:$0xff] %v89
  %p94 = scmp.eq.s32.totalorder 0, 0
  // Predicated region
  $region14: #{projection_layer.2} parent=0 // pred_check
    %p95 = pneg %p94
  $region15: #{projection_layer.2} parent=0 // pred_check_branch
    %97 = sbr.rel (%p95) target = $region17
  $region16: #{projection_layer.2} parent=0 // pred_region
    %s98 = smul.u32 0, 16
    %s99 = scalar_lea.vmem [#allocation2], %s98
    %vm100 = vcmask 7168
    %101 = vst.msk [vmem:[%s99] sm:$0xff] %vm100, -inf
    %102 = vst.msk [vmem:[%s99 + $0x8] sm:$0xff] %vm100, -inf
    %s103 = scalar_lea.vmem [#allocation3], %s98
    %104 = vst.msk [vmem:[%s103] sm:$0xff] %vm100, 0.0
    %105 = vst.msk [vmem:[%s103 + $0x8] sm:$0xff] %vm100, 0.0
  $region17: #{projection_layer.2} parent=0 // pred_fallthru
    _
  %s106 = smul.u32 0, 16
  %s107 = scalar_lea.vmem [#allocation2], %s106
  %v108 = vld [vmem:[%s107] sm:$0xff]
  %v109 = vld [vmem:[%s107 + $0x8] sm:$0xff]
  %s110 = scalar_lea.vmem [#allocation3], %s106
  %v111 = vld [vmem:[%s110] sm:$0xff]
  %v112 = vld [vmem:[%s110 + $0x8] sm:$0xff]
  %113 = vmax.xlane.f32.xlu0 %v86
  %v114 = vpop.xlane.xlu0 %113
  %115 = vmax.xlane.f32.xlu0 %v89
  %v116 = vpop.xlane.xlu0 %115
  %v117 = vmax.f32 %v108, %v114
  %v118 = vmax.f32 %v109, %v116
  %v119 = vsub.f32 %v108, %v117
  %v120 = vsub.f32 %v109, %v118
  %v121 = vmul.f32 %v119, 1.442695
  %v122 = vpow.pop %v121
  %v123 = vmul.f32 %v120, 1.442695
  %v124 = vpow.pop %v123
  %v125 = vmul.f32 %v111, %v122
  %v126 = vmul.f32 %v112, %v124
  %128 = vset.pattern.permute.xlu0 0
  %129 = vperm.xlu0 %128, %v117
  %v130 = vpop.permute.xlu0 %129
  %133 = vset.pattern.permute.xlu0 0
  %134 = vperm.xlu0 %133, %v118
  %v135 = vpop.permute.xlu0 %134
  %v137 = vsub.f32 %v86, %v130
  %v138 = vsub.f32 %v89, %v135
  %v139 = vmul.f32 %v137, 1.442695
  %v140 = vpow.pop %v139
  %v141 = vmul.f32 %v138, 1.442695
  %v142 = vpow.pop %v141
  %143 = vadd.xlane.f32.xlu0 %v140
  %v144 = vpop.xlane.xlu0 %143
  %145 = vadd.xlane.f32.xlu0 %v142
  %v146 = vpop.xlane.xlu0 %145
  %v147 = vadd.f32 %v125, %v144
  %v148 = vadd.f32 %v126, %v146
  %vm149 = vcmask 7168
  %150 = vst.msk [vmem:[%s107] sm:$0xff] %vm149, %v117
  %151 = vst.msk [vmem:[%s107 + $0x8] sm:$0xff] %vm149, %v118
  %152 = vst.msk [vmem:[%s110] sm:$0xff] %vm149, %v147
  %153 = vst.msk [vmem:[%s110 + $0x8] sm:$0xff] %vm149, %v148
  %v154 = vlog2.pop %v147
  %v155 = vmul.f32 %v154, 0.6931472
  %v156 = vlog2.pop %v148
  %v157 = vmul.f32 %v156, 0.6931472
  %v158 = vadd.f32 %v117, %v155
  %v159 = vadd.f32 %v118, %v157
  %160 = vst.msk [vmem:[%s4] sm:$0xff] %vm149, %v158
  %161 = vst.msk [vmem:[%s4 + $0x8] sm:$0xff] %vm149, %v159
  // Predicated region
  $region18: #{projection_layer.2} parent=0 // pred_check
    _
  $region19: #{projection_layer.2} parent=0 // pred_check_branch
    %163 = sbr.rel (0) target = $region21
  $region20: #{projection_layer.2} parent=0 // pred_region
    _
  $region21: #{projection_layer.2} parent=0 // pred_fallthru
    _
  // Predicated region
  $region22: #{projection_layer.2} parent=0 // pred_check
    _
  $region23: #{projection_layer.2} parent=0 // pred_check_branch
    %165 = sbr.rel (0) target = $region25
  $region24: #{projection_layer.2} parent=0 // pred_region
    _
  $region25: #{projection_layer.2} parent=0 // pred_fallthru
    _
  // Predicated region
  $region26: #{projection_layer.2} parent=0 // pred_check
    _
  $region27: #{projection_layer.2} parent=0 // pred_check_branch
    %167 = sbr.rel (0) target = $region29
  $region28: #{projection_layer.2} parent=0 // pred_region
    _
  $region29: #{projection_layer.2} parent=0 // pred_fallthru
    _
  // Predicated region
  $region30: #{projection_layer.2} parent=0 // pred_check
    _
  $region31: #{projection_layer.2} parent=0 // pred_check_branch
    %169 = sbr.rel (0) target = $region33
  $region32: #{projection_layer.2} parent=0 // pred_region
    _
  $region33: #{projection_layer.2} parent=0 // pred_fallthru
    _

</llo_original>
